<compile_context>
chip_gen: v7x
topology: tpu7x:2x2x1
jax: 0.10.0
libtpu: 0.0.40
codegen_flags: <defaults>
</compile_context>

<pallas_src>
import functools

import jax
import jax.numpy as jnp
import numpy as np
from jax.experimental import pallas as pl
from jax.experimental.pallas import tpu as pltpu

_H = 100      # original hidden width of the MLPs
_HP = 128     # padded (lane-dense) hidden width
_MAX_TILE = 4096   # rows per grid step (keeps 4x(tile,128)-ish VMEM footprint sane)


def _sigmoid(x):
    # tanh-form sigmoid: exactly sigmoid(x), but a single EUP op per element.
    return 0.5 * jnp.tanh(0.5 * x) + 0.5


# ----------------------------------------------------------------------------
# Pallas kernel: fused trans-MLP + obs-MLP + weight product
# ----------------------------------------------------------------------------
def _pfrnn_mlp_kernel(h0_ref, noise_ref, x_ref, p0_ref,
                      wmxu_ref, wvec_ref, out_ref):
    f32 = jnp.float32
    bf16 = jnp.bfloat16

    h0 = h0_ref[...]        # (T, 1)
    noise = noise_ref[...]  # (T, 1)
    x = x_ref[...]          # (T, 1)
    p0 = p0_ref[...]        # (T, 1)

    # row-vector / bias slab (static slices of the ref are free)
    wt1_h = wvec_ref[0:1, :]           # (1,128) trans L1 weight row for h0
    wt1_n = wvec_ref[1:2, :]           # (1,128) trans L1 weight row for noise
    bt1 = wvec_ref[2:3, :]             # (1,128)
    bt2 = wvec_ref[3:4, :]             # (1,128)
    wt3_t = wvec_ref[4:5, :]           # (1,128) trans L3 weight (transposed)
    wo1_h = wvec_ref[5:6, :]           # (1,128) obs L1 weight row for h1
    wo1_x = wvec_ref[6:7, :]           # (1,128) obs L1 weight row for x
    bo1 = wvec_ref[7:8, :]             # (1,128)
    bo2 = wvec_ref[8:9, :]             # (1,128)
    wo3_t = wvec_ref[9:10, :]          # (1,128) obs L3 weight (transposed)
    bt3 = wvec_ref[10:11, 0:1]         # (1,1) scalar bias, trans L3
    bo3 = wvec_ref[11:12, 0:1]         # (1,1) scalar bias, obs L3

    wt2 = wmxu_ref[0:_HP, :]           # (128,128) bf16 MXU tile
    wo2 = wmxu_ref[_HP:2 * _HP, :]     # (128,128) bf16 MXU tile

    # ---- fc_trans: Linear(2,100)->sigmoid->Linear(100,100)->sigmoid
    #                ->Linear(100,1)   (no final sigmoid)
    # Layer 1 (K=2) as VPU broadcast MACs.
    a = _sigmoid(h0 * wt1_h + noise * wt1_n + bt1)                  # (T,128)
    # Layer 2: the only real matmul -> MXU, bf16 operands, f32 accumulate.
    a = _sigmoid(
        jnp.dot(a.astype(bf16), wt2, preferred_element_type=f32) + bt2)
    # Layer 3 (N-out=1) as a lane reduce (XLU).
    h1 = jnp.sum(a * wt3_t, axis=-1, keepdims=True) + bt3           # (T,1)

    # ---- fc_obs on concat(h1, x): layer-1 concat expressed as split
    #      broadcast MACs (K=1 each).
    b = _sigmoid(h1 * wo1_h + x * wo1_x + bo1)                       # (T,128)
    b = _sigmoid(
        jnp.dot(b.astype(bf16), wo2, preferred_element_type=f32) + bo2)
    obs_likelihood = _sigmoid(
        jnp.sum(b * wo3_t, axis=-1, keepdims=True) + bo3)            # (T,1)

    # two direct slice stores (no in-kernel concat / lane shift)
    out_ref[:, 0:1] = h1
    out_ref[:, 1:2] = obs_likelihood * p0


# ----------------------------------------------------------------------------
# Tiling / grid selection
# ----------------------------------------------------------------------------
def _prefer_two_steps():
    """True on v7x-class chips (2 TensorCores): want >=2 grid steps."""
    try:
        kind = jax.devices()[0].device_kind.lower()
        return "v7" in kind
    except Exception:  # pragma: no cover - defensive
        return False


def _choose_tiling(n_rows, *, prefer_two_steps, quantum=8, max_tile=_MAX_TILE):
    """Largest 8-row tile up to max_tile; pad N up to a tile multiple."""
    n_eff = max(int(n_rows), quantum)
    steps = max(1, -(-n_eff // max_tile))            # ceil
    if prefer_two_steps and n_eff >= 512:
        steps = max(steps, 2)                        # feed both v7x TCs
    per_step = -(-n_eff // steps)                    # ceil
    tile = -(-per_step // quantum) * quantum         # round up to 8 rows
    n_pad = steps * tile
    return tile, steps, n_pad


def pfrnn_mlps_pallas(h0, noise, x, p0, w_mxu, w_vec, *, tile_n=None):
    N = h0.shape[0]
    if tile_n is None:
        tile_n, steps, n_pad = _choose_tiling(
            N, prefer_two_steps=_prefer_two_steps())
    else:
        steps = -(-N // tile_n)
        n_pad = steps * tile_n

    def _prep(a):
        a = a.astype(jnp.float32).reshape(N, 1)
        if n_pad != N:
            a = jnp.pad(a, ((0, n_pad - N), (0, 0)))
        return a

    h0_p, noise_p, x_p, p0_p = _prep(h0), _prep(noise), _prep(x), _prep(p0)

    row_spec = pl.BlockSpec((tile_n, 1), lambda i: (i, 0))
    cost = pl.CostEstimate(
        flops=4 * _HP * _HP * n_pad,                 # two 128x128 matmuls
        transcendentals=(4 * _HP + 2) * n_pad,       # four sigmoid layers
        bytes_accessed=24 * n_pad + w_mxu.size * 2 + w_vec.size * 4,
    )
    vmem_limit = 48 * 1024 * 1024 if tile_n >= 2048 else None

    out = pl.pallas_call(
        _pfrnn_mlp_kernel,
        out_shape=jax.ShapeDtypeStruct((n_pad, 2), jnp.float32),
        grid=(steps,),
        in_specs=[
            row_spec,                                   # h0
            row_spec,                                   # noise
            row_spec,                                   # x
            row_spec,                                   # p0
            pl.BlockSpec(w_mxu.shape, lambda i: (0, 0)),  # resident bf16 slab
            pl.BlockSpec(w_vec.shape, lambda i: (0, 0)),  # resident vec slab
        ],
        out_specs=pl.BlockSpec((tile_n, 2), lambda i: (i, 0)),
        compiler_params=pltpu.CompilerParams(
            dimension_semantics=("parallel",),
            vmem_limit_bytes=vmem_limit),
        cost_estimate=cost,
    )(h0_p, noise_p, x_p, p0_p, w_mxu, w_vec)

    out = out[:N]
    h1 = out[:, 0:1]
    p1u = out[:, 1:2]
    return h1, p1u


# ----------------------------------------------------------------------------
# Parameter construction (deterministic, PyTorch nn.Linear default init)
# ----------------------------------------------------------------------------
def _linear_params(key, fan_in, fan_out):
    kw, kb = jax.random.split(key)
    bound = 1.0 / np.sqrt(fan_in)
    w = jax.random.uniform(kw, (fan_in, fan_out), jnp.float32, -bound, bound)
    b = jax.random.uniform(kb, (1, fan_out), jnp.float32, -bound, bound)
    return w, b


def make_pfrnn_params(key, hidden_size=1, ext_obs=1):
    ks = jax.random.split(key, 6)
    # fc_obs: Linear(ext_obs + h_dim, 100), Linear(100, 100), Linear(100, 1)
    wo1, bo1 = _linear_params(ks[0], ext_obs + hidden_size, 100)
    wo2, bo2 = _linear_params(ks[1], 100, 100)
    wo3, bo3 = _linear_params(ks[2], 100, 1)
    # fc_trans: Linear(h_dim + 1, 100), Linear(100, 100), Linear(100, 1)
    wt1, bt1 = _linear_params(ks[3], hidden_size + 1, 100)
    wt2, bt2 = _linear_params(ks[4], 100, 100)
    wt3, bt3 = _linear_params(ks[5], 100, 1)
    return dict(
        wt1=wt1, bt1=bt1, wt2=wt2, bt2=bt2, wt3=wt3, bt3=bt3,
        wo1=wo1, bo1=bo1, wo2=wo2, bo2=bo2, wo3=wo3, bo3=bo3,
    )


def pack_pfrnn_params(p):
    """Zero-pad 100->128 and pack into two resident slabs (MXU slab in bf16)."""
    assert p["wt1"].shape == (2, _H) and p["wo1"].shape == (2, _H), (
        "packed kernel assumes hidden_size == 1 and ext_obs == 1 "
        "(as in the PyTorch module defaults)")

    def pad_cols(m):
        return jnp.pad(m, ((0, 0), (0, _HP - m.shape[1])))

    def pad_square(m):
        return jnp.pad(m, ((0, _HP - m.shape[0]), (0, _HP - m.shape[1])))

    # MXU slab: the two 100x100 (-> 128x128) layers, stacked, bf16.
    w_mxu = jnp.concatenate(
        [pad_square(p["wt2"]), pad_square(p["wo2"])],
        axis=0).astype(jnp.bfloat16)                     # (256, 128) bf16

    zero_row = jnp.zeros((1, _HP), jnp.float32)
    rows = [
        pad_cols(p["wt1"][0:1, :]),          # 0: trans L1 row for h0
        pad_cols(p["wt1"][1:2, :]),          # 1: trans L1 row for noise
        pad_cols(p["bt1"]),                  # 2
        pad_cols(p["bt2"]),                  # 3
        pad_cols(p["wt3"].T),                # 4: trans L3 weight, transposed
        pad_cols(p["wo1"][0:1, :]),          # 5: obs L1 row for h1
        pad_cols(p["wo1"][1:2, :]),          # 6: obs L1 row for x
        pad_cols(p["bo1"]),                  # 7
        pad_cols(p["bo2"]),                  # 8
        pad_cols(p["wo3"].T),                # 9: obs L3 weight, transposed
        pad_cols(p["bt3"]),                  # 10: scalar at lane 0
        pad_cols(p["bo3"]),                  # 11: scalar at lane 0
        zero_row, zero_row, zero_row, zero_row,   # 12..15: pad to 16 sublanes
    ]
    w_vec = jnp.concatenate(rows, axis=0)    # (16, 128) f32
    return dict(w_mxu=w_mxu, w_vec=w_vec)


# ----------------------------------------------------------------------------
# Full forward pass (kernel + resampling glue)
# ----------------------------------------------------------------------------
def pfrnn_forward(packed, input_, hx, key, num_particles, resamp_alpha=0.1):
    h0, p0 = hx                      # [K*B, h_dim], [K*B, 1]
    K = num_particles
    N = h0.shape[0]
    B = N // K

    key_noise, key_samp = jax.random.split(key)
    # random_input ~ N(0, 1) with h0's shape (torch .normal_() equivalent)
    # TODO(synk): fold into the kernel with pltpu.prng_seed/stateful_normal
    # (removes this launch + one HBM operand) when running a fused scan.
    noise = jax.random.normal(key_noise, h0.shape, dtype=jnp.float32)

    h1, p1u = pfrnn_mlps_pallas(h0, noise, input_, p0,
                                packed["w_mxu"], packed["w_vec"])

    # p1 = obs_likelihood * p0, normalized over the particle axis
    p1 = p1u.reshape(K, B, 1)
    p1 = p1 / jnp.sum(p1, axis=0, keepdims=True)

    # ---- soft resampling -----------------------------------------------
    # q(i) = alpha * w_i + (1 - alpha) / K
    resamp_prob = resamp_alpha * p1 + (1.0 - resamp_alpha) / K   # [K, B, 1]
    probs_bk = jnp.transpose(resamp_prob.reshape(K, B), (1, 0))  # [B, K]
    # TODO(synk): torch.multinomial replaced by jax.random.categorical
    # (different RNG stream; same distribution).
    logits = jnp.log(probs_bk)                                   # [B, K]
    indices = jax.random.categorical(key_samp, logits, shape=(K, B))  # [K, B]
    flat_indices = (indices * B + jnp.arange(B)[None, :]).reshape(-1)  # [K*B]

    h1_new = h1[flat_indices]                                    # [N, h_dim]
    # TODO(synk): exp() of a linear-space weight is kept verbatim from the
    # PyTorch module (its resampling() assumes log-weights).
    prob_new = jnp.exp(p1.reshape(-1, 1)[flat_indices])          # [N, 1]
    prob_new = prob_new / (resamp_alpha * prob_new
                           + (1.0 - resamp_alpha) / K)
    prob_new = prob_new.reshape(K, B, 1)
    prob_new = prob_new / jnp.sum(prob_new, axis=0, keepdims=True)
    prob_new = prob_new.reshape(-1, 1)
    return h1_new, prob_new


# ----------------------------------------------------------------------------
# Pure-JAX f32 reference for the kernel portion (correctness check, un-padded)
# ----------------------------------------------------------------------------
def _ref_mlps(h0, noise, x, p0, p):
    xt = jnp.concatenate([h0, noise], axis=1)
    a = jax.nn.sigmoid(xt @ p["wt1"] + p["bt1"])
    a = jax.nn.sigmoid(a @ p["wt2"] + p["bt2"])
    h1 = a @ p["wt3"] + p["bt3"]
    hx = jnp.concatenate([h1, x], axis=1)
    b = jax.nn.sigmoid(hx @ p["wo1"] + p["bo1"])
    b = jax.nn.sigmoid(b @ p["wo2"] + p["bo2"])
    obs = jax.nn.sigmoid(b @ p["wo3"] + p["bo3"])
    return h1, obs * p0


if __name__ == "__main__":
    num_particles = 8
    batch_size = 4
    hidden_size = 1
    ext_obs = 1
    N = num_particles * batch_size

    root = jax.random.PRNGKey(0)
    k_param, k_h0, k_x, k_fwd, k_noise_chk, k_odd = jax.random.split(root, 6)

    params = make_pfrnn_params(k_param, hidden_size=hidden_size,
                               ext_obs=ext_obs)
    packed = pack_pfrnn_params(params)

    h0 = jax.random.normal(k_h0, (N, hidden_size), dtype=jnp.float32)
    input_ = jax.random.normal(k_x, (N, ext_obs), dtype=jnp.float32)
    p0 = jnp.full((N, 1), 1.0 / num_particles, dtype=jnp.float32)

    # correctness check of the Pallas-kernel portion against the f32 JAX
    # reference (kernel uses bf16 MXU operands -> tolerance loosened).
    noise_chk = jax.random.normal(k_noise_chk, h0.shape, dtype=jnp.float32)
    h1_k, p1u_k = pfrnn_mlps_pallas(h0, noise_chk, input_, p0,
                                    packed["w_mxu"], packed["w_vec"])
    h1_r, p1u_r = _ref_mlps(h0, noise_chk, input_, p0, params)
    assert jnp.allclose(h1_k, h1_r, atol=1e-2), "h1 mismatch vs reference"
    assert jnp.allclose(p1u_k, p1u_r, atol=1e-2), "p1 mismatch vs reference"

    # second check at a row count that is NOT a multiple of 8 -> exercises
    # the row-padding / tail-slicing path.
    N_odd = 7 * 5
    h0_o = jax.random.normal(k_odd, (N_odd, hidden_size), dtype=jnp.float32)
    x_o = jax.random.normal(k_x, (N_odd, ext_obs), dtype=jnp.float32)
    n_o = jax.random.normal(k_noise_chk, (N_odd, hidden_size), jnp.float32)
    p0_o = jnp.full((N_odd, 1), 1.0 / 7, dtype=jnp.float32)
    h1_ko, p1u_ko = pfrnn_mlps_pallas(h0_o, n_o, x_o, p0_o,
                                      packed["w_mxu"], packed["w_vec"])
    h1_ro, p1u_ro = _ref_mlps(h0_o, n_o, x_o, p0_o, params)
    assert h1_ko.shape == (N_odd, 1) and p1u_ko.shape == (N_odd, 1)
    assert jnp.allclose(h1_ko, h1_ro, atol=1e-2), "h1 mismatch (padded tail)"
    assert jnp.allclose(p1u_ko, p1u_ro, atol=1e-2), "p1 mismatch (padded tail)"

    # full forward pass
    fwd = jax.jit(functools.partial(pfrnn_forward,
                                    num_particles=num_particles,
                                    resamp_alpha=0.1))
    h1_new, p1_new = fwd(packed, input_, (h0, p0), k_fwd)
    jax.block_until_ready((h1_new, p1_new))

    assert h1_new.shape == (N, hidden_size)
    assert p1_new.shape == (N, 1)
    assert bool(jnp.all(jnp.isfinite(h1_new))) and bool(
        jnp.all(jnp.isfinite(p1_new)))

    print("KERNEL_OK")
</pallas_src>

<mosaic_0001>
module attributes {stable_mosaic.version = 11 : i64} {
  func.func @_pfrnn_mlp_kernel(%arg0: i32, %arg1: memref<32x1xf32, #tpu.memory_space<vmem>>, %arg2: memref<32x1xf32, #tpu.memory_space<vmem>>, %arg3: memref<32x1xf32, #tpu.memory_space<vmem>>, %arg4: memref<32x1xf32, #tpu.memory_space<vmem>>, %arg5: memref<256x128xbf16, #tpu.memory_space<vmem>>, %arg6: memref<16x128xf32, #tpu.memory_space<vmem>>, %arg7: memref<32x2xf32, #tpu.memory_space<vmem>>) attributes {dimension_semantics = [#tpu.dimension_semantics<parallel>], iteration_bounds = array<i64: 1>, scalar_prefetch = 0 : i64, scratch_operands = 0 : i64, tpu.core_type = #tpu.core_type<tc>, window_params = [{transform_indices = @transform_0, window_bounds = array<i64: 32, 1>}, {transform_indices = @transform_1, window_bounds = array<i64: 32, 1>}, {transform_indices = @transform_2, window_bounds = array<i64: 32, 1>}, {transform_indices = @transform_3, window_bounds = array<i64: 32, 1>}, {pipeline_mode = #tpu.pipeline_mode<synchronous>, transform_indices = @transform_4, window_bounds = array<i64: 256, 128>}, {pipeline_mode = #tpu.pipeline_mode<synchronous>, transform_indices = @transform_5, window_bounds = array<i64: 16, 128>}, {transform_indices = @transform_6, window_bounds = array<i64: 32, 2>}]} {
    %c0 = arith.constant 0 : index
    %c0_0 = arith.constant 0 : index
    %0 = vector.load %arg1[%c0, %c0_0] : memref<32x1xf32, #tpu.memory_space<vmem>>, vector<32x1xf32>
    %c0_1 = arith.constant 0 : index
    %c0_2 = arith.constant 0 : index
    %1 = vector.load %arg2[%c0_1, %c0_2] : memref<32x1xf32, #tpu.memory_space<vmem>>, vector<32x1xf32>
    %c0_3 = arith.constant 0 : index
    %c0_4 = arith.constant 0 : index
    %2 = vector.load %arg3[%c0_3, %c0_4] : memref<32x1xf32, #tpu.memory_space<vmem>>, vector<32x1xf32>
    %c0_5 = arith.constant 0 : index
    %c0_6 = arith.constant 0 : index
    %3 = vector.load %arg4[%c0_5, %c0_6] : memref<32x1xf32, #tpu.memory_space<vmem>>, vector<32x1xf32>
    %c0_7 = arith.constant 0 : index
    %c0_8 = arith.constant 0 : index
    %4 = vector.load %arg6[%c0_7, %c0_8] : memref<16x128xf32, #tpu.memory_space<vmem>>, vector<1x128xf32>
    %c1 = arith.constant 1 : index
    %c0_9 = arith.constant 0 : index
    %5 = vector.load %arg6[%c1, %c0_9] : memref<16x128xf32, #tpu.memory_space<vmem>>, vector<1x128xf32>
    %c2 = arith.constant 2 : index
    %c0_10 = arith.constant 0 : index
    %6 = vector.load %arg6[%c2, %c0_10] : memref<16x128xf32, #tpu.memory_space<vmem>>, vector<1x128xf32>
    %c3 = arith.constant 3 : index
    %c0_11 = arith.constant 0 : index
    %7 = vector.load %arg6[%c3, %c0_11] : memref<16x128xf32, #tpu.memory_space<vmem>>, vector<1x128xf32>
    %c4 = arith.constant 4 : index
    %c0_12 = arith.constant 0 : index
    %8 = vector.load %arg6[%c4, %c0_12] : memref<16x128xf32, #tpu.memory_space<vmem>>, vector<1x128xf32>
    %c5 = arith.constant 5 : index
    %c0_13 = arith.constant 0 : index
    %9 = vector.load %arg6[%c5, %c0_13] : memref<16x128xf32, #tpu.memory_space<vmem>>, vector<1x128xf32>
    %c6 = arith.constant 6 : index
    %c0_14 = arith.constant 0 : index
    %10 = vector.load %arg6[%c6, %c0_14] : memref<16x128xf32, #tpu.memory_space<vmem>>, vector<1x128xf32>
    %c7 = arith.constant 7 : index
    %c0_15 = arith.constant 0 : index
    %11 = vector.load %arg6[%c7, %c0_15] : memref<16x128xf32, #tpu.memory_space<vmem>>, vector<1x128xf32>
    %c8 = arith.constant 8 : index
    %c0_16 = arith.constant 0 : index
    %12 = vector.load %arg6[%c8, %c0_16] : memref<16x128xf32, #tpu.memory_space<vmem>>, vector<1x128xf32>
    %c9 = arith.constant 9 : index
    %c0_17 = arith.constant 0 : index
    %13 = vector.load %arg6[%c9, %c0_17] : memref<16x128xf32, #tpu.memory_space<vmem>>, vector<1x128xf32>
    %c10 = arith.constant 10 : index
    %c0_18 = arith.constant 0 : index
    %14 = vector.load %arg6[%c10, %c0_18] : memref<16x128xf32, #tpu.memory_space<vmem>>, vector<1x1xf32>
    %c11 = arith.constant 11 : index
    %c0_19 = arith.constant 0 : index
    %15 = vector.load %arg6[%c11, %c0_19] : memref<16x128xf32, #tpu.memory_space<vmem>>, vector<1x1xf32>
    %c0_20 = arith.constant 0 : index
    %c0_21 = arith.constant 0 : index
    %16 = vector.load %arg5[%c0_20, %c0_21] : memref<256x128xbf16, #tpu.memory_space<vmem>>, vector<128x128xbf16>
    %c128 = arith.constant 128 : index
    %c0_22 = arith.constant 0 : index
    %17 = vector.load %arg5[%c128, %c0_22] : memref<256x128xbf16, #tpu.memory_space<vmem>>, vector<128x128xbf16>
    %18 = vector.broadcast %0 : vector<32x1xf32> to vector<32x128xf32>
    %19 = vector.broadcast %4 : vector<1x128xf32> to vector<32x128xf32>
    %20 = arith.mulf %18, %19 : vector<32x128xf32>
    %21 = vector.broadcast %1 : vector<32x1xf32> to vector<32x128xf32>
    %22 = vector.broadcast %5 : vector<1x128xf32> to vector<32x128xf32>
    %23 = arith.mulf %21, %22 : vector<32x128xf32>
    %24 = arith.addf %20, %23 : vector<32x128xf32>
    %25 = vector.broadcast %6 : vector<1x128xf32> to vector<32x128xf32>
    %26 = arith.addf %24, %25 : vector<32x128xf32>
    %cst = arith.constant 5.000000e-01 : f32
    %27 = vector.broadcast %cst : f32 to vector<32x128xf32>
    %28 = arith.mulf %27, %26 : vector<32x128xf32>
    %29 = math.tanh %28 : vector<32x128xf32>
    %cst_23 = arith.constant 5.000000e-01 : f32
    %30 = vector.broadcast %cst_23 : f32 to vector<32x128xf32>
    %31 = arith.mulf %30, %29 : vector<32x128xf32>
    %cst_24 = arith.constant 5.000000e-01 : f32
    %32 = vector.broadcast %cst_24 : f32 to vector<32x128xf32>
    %33 = arith.addf %31, %32 : vector<32x128xf32>
    %34 = arith.truncf %33 : vector<32x128xf32> to vector<32x128xbf16>
    %cst_25 = arith.constant dense<0.000000e+00> : vector<32x128xf32>
    %35 = tpu.matmul %34, %16, %cst_25 {dimension_numbers = #tpu.dot_dimension_numbers<[1], [0], [0], [1], [0, 0, 1, 1], [], []>} : vector<32x128xbf16>, vector<128x128xbf16>, vector<32x128xf32> -> vector<32x128xf32>
    %36 = vector.broadcast %7 : vector<1x128xf32> to vector<32x128xf32>
    %37 = arith.addf %35, %36 : vector<32x128xf32>
    %cst_26 = arith.constant 5.000000e-01 : f32
    %38 = vector.broadcast %cst_26 : f32 to vector<32x128xf32>
    %39 = arith.mulf %38, %37 : vector<32x128xf32>
    %40 = math.tanh %39 : vector<32x128xf32>
    %cst_27 = arith.constant 5.000000e-01 : f32
    %41 = vector.broadcast %cst_27 : f32 to vector<32x128xf32>
    %42 = arith.mulf %41, %40 : vector<32x128xf32>
    %cst_28 = arith.constant 5.000000e-01 : f32
    %43 = vector.broadcast %cst_28 : f32 to vector<32x128xf32>
    %44 = arith.addf %42, %43 : vector<32x128xf32>
    %45 = vector.broadcast %8 : vector<1x128xf32> to vector<32x128xf32>
    %46 = arith.mulf %44, %45 : vector<32x128xf32>
    %cst_29 = arith.constant dense<0.000000e+00> : vector<32xf32>
    %47 = vector.multi_reduction <add>, %46, %cst_29 [1] : vector<32x128xf32> to vector<32xf32>
    %48 = vector.shape_cast %47 : vector<32xf32> to vector<32x1xf32>
    %49 = vector.broadcast %14 : vector<1x1xf32> to vector<32x1xf32>
    %50 = arith.addf %48, %49 : vector<32x1xf32>
    %51 = vector.broadcast %50 : vector<32x1xf32> to vector<32x128xf32>
    %52 = vector.broadcast %9 : vector<1x128xf32> to vector<32x128xf32>
    %53 = arith.mulf %51, %52 : vector<32x128xf32>
    %54 = vector.broadcast %2 : vector<32x1xf32> to vector<32x128xf32>
    %55 = vector.broadcast %10 : vector<1x128xf32> to vector<32x128xf32>
    %56 = arith.mulf %54, %55 : vector<32x128xf32>
    %57 = arith.addf %53, %56 : vector<32x128xf32>
    %58 = vector.broadcast %11 : vector<1x128xf32> to vector<32x128xf32>
    %59 = arith.addf %57, %58 : vector<32x128xf32>
    %cst_30 = arith.constant 5.000000e-01 : f32
    %60 = vector.broadcast %cst_30 : f32 to vector<32x128xf32>
    %61 = arith.mulf %60, %59 : vector<32x128xf32>
    %62 = math.tanh %61 : vector<32x128xf32>
    %cst_31 = arith.constant 5.000000e-01 : f32
    %63 = vector.broadcast %cst_31 : f32 to vector<32x128xf32>
    %64 = arith.mulf %63, %62 : vector<32x128xf32>
    %cst_32 = arith.constant 5.000000e-01 : f32
    %65 = vector.broadcast %cst_32 : f32 to vector<32x128xf32>
    %66 = arith.addf %64, %65 : vector<32x128xf32>
    %67 = arith.truncf %66 : vector<32x128xf32> to vector<32x128xbf16>
    %cst_33 = arith.constant dense<0.000000e+00> : vector<32x128xf32>
    %68 = tpu.matmul %67, %17, %cst_33 {dimension_numbers = #tpu.dot_dimension_numbers<[1], [0], [0], [1], [0, 0, 1, 1], [], []>} : vector<32x128xbf16>, vector<128x128xbf16>, vector<32x128xf32> -> vector<32x128xf32>
    %69 = vector.broadcast %12 : vector<1x128xf32> to vector<32x128xf32>
    %70 = arith.addf %68, %69 : vector<32x128xf32>
    %cst_34 = arith.constant 5.000000e-01 : f32
    %71 = vector.broadcast %cst_34 : f32 to vector<32x128xf32>
    %72 = arith.mulf %71, %70 : vector<32x128xf32>
    %73 = math.tanh %72 : vector<32x128xf32>
    %cst_35 = arith.constant 5.000000e-01 : f32
    %74 = vector.broadcast %cst_35 : f32 to vector<32x128xf32>
    %75 = arith.mulf %74, %73 : vector<32x128xf32>
    %cst_36 = arith.constant 5.000000e-01 : f32
    %76 = vector.broadcast %cst_36 : f32 to vector<32x128xf32>
    %77 = arith.addf %75, %76 : vector<32x128xf32>
    %78 = vector.broadcast %13 : vector<1x128xf32> to vector<32x128xf32>
    %79 = arith.mulf %77, %78 : vector<32x128xf32>
    %cst_37 = arith.constant dense<0.000000e+00> : vector<32xf32>
    %80 = vector.multi_reduction <add>, %79, %cst_37 [1] : vector<32x128xf32> to vector<32xf32>
    %81 = vector.shape_cast %80 : vector<32xf32> to vector<32x1xf32>
    %82 = vector.broadcast %15 : vector<1x1xf32> to vector<32x1xf32>
    %83 = arith.addf %81, %82 : vector<32x1xf32>
    %cst_38 = arith.constant 5.000000e-01 : f32
    %84 = vector.broadcast %cst_38 : f32 to vector<32x1xf32>
    %85 = arith.mulf %84, %83 : vector<32x1xf32>
    %86 = math.tanh %85 : vector<32x1xf32>
    %cst_39 = arith.constant 5.000000e-01 : f32
    %87 = vector.broadcast %cst_39 : f32 to vector<32x1xf32>
    %88 = arith.mulf %87, %86 : vector<32x1xf32>
    %cst_40 = arith.constant 5.000000e-01 : f32
    %89 = vector.broadcast %cst_40 : f32 to vector<32x1xf32>
    %90 = arith.addf %88, %89 : vector<32x1xf32>
    %c0_41 = arith.constant 0 : index
    %c0_42 = arith.constant 0 : index
    %91 = vector.load %arg7[%c0_41, %c0_42] : memref<32x2xf32, #tpu.memory_space<vmem>>, vector<32x1xf32>
    tpu.vector_store %arg7[%c0_41, %c0_42], %50 {strides = array<i32>} : memref<32x2xf32, #tpu.memory_space<vmem>>, vector<32x1xf32>,
    %92 = arith.mulf %90, %3 : vector<32x1xf32>
    %c0_43 = arith.constant 0 : index
    %c1_44 = arith.constant 1 : index
    %93 = vector.load %arg7[%c0_43, %c1_44] : memref<32x2xf32, #tpu.memory_space<vmem>>, vector<32x1xf32>
    tpu.vector_store %arg7[%c0_43, %c1_44], %92 {strides = array<i32>} : memref<32x2xf32, #tpu.memory_space<vmem>>, vector<32x1xf32>,
    return
  }
  func.func @transform_0(%arg0: i32) -> (i32, i32) {
    %c0_i32 = arith.constant 0 : i32
    %c0_i32_0 = arith.constant 0 : i32
    return %arg0, %c0_i32 : i32, i32
  }
  func.func @transform_1(%arg0: i32) -> (i32, i32) {
    %c0_i32 = arith.constant 0 : i32
    %c0_i32_0 = arith.constant 0 : i32
    return %arg0, %c0_i32 : i32, i32
  }
  func.func @transform_2(%arg0: i32) -> (i32, i32) {
    %c0_i32 = arith.constant 0 : i32
    %c0_i32_0 = arith.constant 0 : i32
    return %arg0, %c0_i32 : i32, i32
  }
  func.func @transform_3(%arg0: i32) -> (i32, i32) {
    %c0_i32 = arith.constant 0 : i32
    %c0_i32_0 = arith.constant 0 : i32
    return %arg0, %c0_i32 : i32, i32
  }
  func.func @transform_4(%arg0: i32) -> (i32, i32) {
    %c0_i32 = arith.constant 0 : i32
    %c0_i32_0 = arith.constant 0 : i32
    %c0_i32_1 = arith.constant 0 : i32
    return %c0_i32, %c0_i32_0 : i32, i32
  }
  func.func @transform_5(%arg0: i32) -> (i32, i32) {
    %c0_i32 = arith.constant 0 : i32
    %c0_i32_0 = arith.constant 0 : i32
    %c0_i32_1 = arith.constant 0 : i32
    return %c0_i32, %c0_i32_0 : i32, i32
  }
  func.func @transform_6(%arg0: i32) -> (i32, i32) {
    %c0_i32 = arith.constant 0 : i32
    %c0_i32_0 = arith.constant 0 : i32
    return %arg0, %c0_i32 : i32, i32
  }
}

</mosaic_0001>

<llo_original>
// kernel: tpu_custom_call.1
$region0: #{tpu_custom_call.1}
  #allocation0 [shape = 'u32[]', space=smem, size = 0x4, offset = 0x4, fixed_abs, tag = 'smem constant byte address 0x4 - core index']
  #allocation1 [shape = 'u32[144,128]{1,0:T(1,128)}', space=vmem, size = 0x12000, scoped, tag = 'internal scratch']
  %s0 = inlined_call_operand.vmem [shape: f32[32,1], index: 0, kind: input, shape index: {}]
  %s1 = inlined_call_operand.vmem [shape: f32[32,1], index: 1, kind: input, shape index: {}]
  %s2 = inlined_call_operand.vmem [shape: f32[32,1], index: 2, kind: input, shape index: {}]
  %s3 = inlined_call_operand.vmem [shape: f32[32,1], index: 3, kind: input, shape index: {}]
  %s4 = inlined_call_operand.vmem [shape: bf16[256,128], index: 4, kind: input, shape index: {}]
  %s5 = inlined_call_operand.vmem [shape: f32[16,128], index: 5, kind: input, shape index: {}]
  %s6 = inlined_call_operand.vmem [shape: f32[32,2], index: 6, kind: output, shape index: {}]
  %s7 = sld [smem:[#allocation0]]
  $region34: #{tpu_custom_call.1} parent=0
    _
  %s9 = ssub.s32 1, %s7
  %s10 = scalar_select 0, %s9, %s7
  // Predicated region
  $region2: #{tpu_custom_call.1} parent=0 // pred_check
    _
  $region3: #{tpu_custom_call.1} parent=0 // pred_check_branch
    %12 = sbr.rel (0) target = $region5
  $region4: #{tpu_custom_call.1} parent=0 // pred_region
    _
  $region5: #{tpu_custom_call.1} parent=0 // pred_fallthru
    _
  // Predicated region
  $region6: #{tpu_custom_call.1} parent=0 // pred_check
    _
  $region7: #{tpu_custom_call.1} parent=0 // pred_check_branch
    %14 = sbr.rel (0) target = $region9
  $region8: #{tpu_custom_call.1} parent=0 // pred_region
    _
  $region9: #{tpu_custom_call.1} parent=0 // pred_fallthru
    _
  // Predicated region
  $region10: #{tpu_custom_call.1} parent=0 // pred_check
    _
  $region11: #{tpu_custom_call.1} parent=0 // pred_check_branch
    %16 = sbr.rel (0) target = $region13
  $region12: #{tpu_custom_call.1} parent=0 // pred_region
    _
  $region13: #{tpu_custom_call.1} parent=0 // pred_fallthru
    _
  // Predicated region
  $region14: #{tpu_custom_call.1} parent=0 // pred_check
    _
  $region15: #{tpu_custom_call.1} parent=0 // pred_check_branch
    %18 = sbr.rel (0) target = $region17
  $region16: #{tpu_custom_call.1} parent=0 // pred_region
    _
  $region17: #{tpu_custom_call.1} parent=0 // pred_fallthru
    _
  // Predicated region
  $region18: #{tpu_custom_call.1} parent=0 // pred_check
    _
  $region19: #{tpu_custom_call.1} parent=0 // pred_check_branch
    %20 = sbr.rel (0) target = $region21
  $region20: #{tpu_custom_call.1} parent=0 // pred_region
    _
  $region21: #{tpu_custom_call.1} parent=0 // pred_fallthru
    _
  // Predicated region
  $region22: #{tpu_custom_call.1} parent=0 // pred_check
    _
  $region23: #{tpu_custom_call.1} parent=0 // pred_check_branch
    %22 = sbr.rel (0) target = $region25
  $region24: #{tpu_custom_call.1} parent=0 // pred_region
    _
  $region25: #{tpu_custom_call.1} parent=0 // pred_fallthru
    _
  %v24 = vld [vmem:[%s0] sm:$0xff]
  %v25 = vld [vmem:[%s0 + $0x8] sm:$0xff]
  %v26 = vld [vmem:[%s0 + $0x10] sm:$0xff]
  %v27 = vld [vmem:[%s0 + $0x18] sm:$0xff]
  %v28 = vld [vmem:[%s1] sm:$0xff]
  %v29 = vld [vmem:[%s1 + $0x8] sm:$0xff]
  %v30 = vld [vmem:[%s1 + $0x10] sm:$0xff]
  %v31 = vld [vmem:[%s1 + $0x18] sm:$0xff]
  %v32 = vld [vmem:[%s2] sm:$0xff]
  %v33 = vld [vmem:[%s2 + $0x8] sm:$0xff]
  %v34 = vld [vmem:[%s2 + $0x10] sm:$0xff]
  %v35 = vld [vmem:[%s2 + $0x18] sm:$0xff]
  %v36 = vld [vmem:[%s3] sm:$0xff]
  %v37 = vld [vmem:[%s3 + $0x8] sm:$0xff]
  %v38 = vld [vmem:[%s3 + $0x10] sm:$0xff]
  %v39 = vld [vmem:[%s3 + $0x18] sm:$0xff]
  %v40 = vld [vmem:[%s5] sm:$0x1]
  %v41 = vld [vmem:[%s5 + $0x1] sm:$0x1]
  %v42 = vld [vmem:[%s5 + $0x2] sm:$0x1]
  %v43 = vld [vmem:[%s5 + $0x3] sm:$0x1]
  %v44 = vld [vmem:[%s5 + $0x4] sm:$0x1]
  %v45 = vld [vmem:[%s5 + $0x5] sm:$0x1]
  %v46 = vld [vmem:[%s5 + $0x6] sm:$0x1]
  %v47 = vld [vmem:[%s5 + $0x7] sm:$0x1]
  %v48 = vld [vmem:[%s5 + $0x8] sm:$0x1]
  %v49 = vld [vmem:[%s5 + $0x9] sm:$0x1]
  %v50 = vld [vmem:[%s5 + $0xa] sm:$0x1]
  %v51 = vld [vmem:[%s5 + $0xb] sm:$0x1]
  %v52 = vld [vmem:[%s4] sm:$0xf]
  %v53 = vld [vmem:[%s4 + $0x4] sm:$0xf]
  %v54 = vld [vmem:[%s4 + $0x8] sm:$0xf]
  %v55 = vld [vmem:[%s4 + $0xc] sm:$0xf]
  %v56 = vld [vmem:[%s4 + $0x10] sm:$0xf]
  %v57 = vld [vmem:[%s4 + $0x14] sm:$0xf]
  %v58 = vld [vmem:[%s4 + $0x18] sm:$0xf]
  %v59 = vld [vmem:[%s4 + $0x1c] sm:$0xf]
  %v60 = vld [vmem:[%s4 + $0x20] sm:$0xf]
  %v61 = vld [vmem:[%s4 + $0x24] sm:$0xf]
  %v62 = vld [vmem:[%s4 + $0x28] sm:$0xf]
  %v63 = vld [vmem:[%s4 + $0x2c] sm:$0xf]
  %v64 = vld [vmem:[%s4 + $0x30] sm:$0xf]
  %v65 = vld [vmem:[%s4 + $0x34] sm:$0xf]
  %v66 = vld [vmem:[%s4 + $0x38] sm:$0xf]
  %v67 = vld [vmem:[%s4 + $0x3c] sm:$0xf]
  %v68 = vld [vmem:[%s4 + $0x40] sm:$0xf]
  %v69 = vld [vmem:[%s4 + $0x44] sm:$0xf]
  %v70 = vld [vmem:[%s4 + $0x48] sm:$0xf]
  %v71 = vld [vmem:[%s4 + $0x4c] sm:$0xf]
  %v72 = vld [vmem:[%s4 + $0x50] sm:$0xf]
  %v73 = vld [vmem:[%s4 + $0x54] sm:$0xf]
  %v74 = vld [vmem:[%s4 + $0x58] sm:$0xf]
  %v75 = vld [vmem:[%s4 + $0x5c] sm:$0xf]
  %v76 = vld [vmem:[%s4 + $0x60] sm:$0xf]
  %v77 = vld [vmem:[%s4 + $0x64] sm:$0xf]
  %v78 = vld [vmem:[%s4 + $0x68] sm:$0xf]
  %v79 = vld [vmem:[%s4 + $0x6c] sm:$0xf]
  %v80 = vld [vmem:[%s4 + $0x70] sm:$0xf]
  %v81 = vld [vmem:[%s4 + $0x74] sm:$0xf]
  %v82 = vld [vmem:[%s4 + $0x78] sm:$0xf]
  %v83 = vld [vmem:[%s4 + $0x7c] sm:$0xf]
  %85 = vset.pattern.permute.xlu0 0
  %86 = vperm.xlu0 %85, %v24
  %v87 = vpop.permute.xlu0 %86
  %90 = vset.pattern.permute.xlu0 0
  %91 = vperm.xlu0 %90, %v25
  %v92 = vpop.permute.xlu0 %91
  %95 = vset.pattern.permute.xlu0 0
  %96 = vperm.xlu0 %95, %v26
  %v97 = vpop.permute.xlu0 %96
  %100 = vset.pattern.permute.xlu0 0
  %101 = vperm.xlu0 %100, %v27
  %v102 = vpop.permute.xlu0 %101
  %v104 = vlaneseq
  %v105 = vshrl.u32 %v104, 7
  %v106 = vsub.s32 0, %v105
  %v107 = vrot.slane %v40, %v106
  %v108 = vmul.f32 %v87, %v107
  %v109 = vmul.f32 %v92, %v107
  %v110 = vmul.f32 %v97, %v107
  %v111 = vmul.f32 %v102, %v107
  %113 = vset.pattern.permute.xlu0 0
  %114 = vperm.xlu0 %113, %v28
  %v115 = vpop.permute.xlu0 %114
  %118 = vset.pattern.permute.xlu0 0
  %119 = vperm.xlu0 %118, %v29
  %v120 = vpop.permute.xlu0 %119
  %123 = vset.pattern.permute.xlu0 0
  %124 = vperm.xlu0 %123, %v30
  %v125 = vpop.permute.xlu0 %124
  %128 = vset.pattern.permute.xlu0 0
  %129 = vperm.xlu0 %128, %v31
  %v130 = vpop.permute.xlu0 %129
  %v132 = vlaneseq
  %v133 = vshrl.u32 %v132, 7
  %v134 = vsub.s32 0, %v133
  %v135 = vrot.slane %v41, %v134
  %v136 = vmul.f32 %v115, %v135
  %v137 = vmul.f32 %v120, %v135
  %v138 = vmul.f32 %v125, %v135
  %v139 = vmul.f32 %v130, %v135
  %v140 = vadd.f32 %v108, %v136
  %v141 = vadd.f32 %v109, %v137
  %v142 = vadd.f32 %v110, %v138
  %v143 = vadd.f32 %v111, %v139
  %v144 = vlaneseq
  %v145 = vshrl.u32 %v144, 7
  %v146 = vsub.s32 0, %v145
  %v147 = vrot.slane %v42, %v146
  %v148 = vadd.f32 %v140, %v147
  %v149 = vadd.f32 %v141, %v147
  %v150 = vadd.f32 %v142, %v147
  %v151 = vadd.f32 %v143, %v147
  %v152 = vmul.f32 %v148, 0.5
  %v153 = vmul.f32 %v149, 0.5
  %v154 = vmul.f32 %v150, 0.5
  %v155 = vmul.f32 %v151, 0.5
  %v156 = vtanh.pop %v152
  %v157 = vtanh.pop %v153
  %v158 = vtanh.pop %v154
  %v159 = vtanh.pop %v155
  %v160 = vmul.f32 %v156, 0.5
  %v161 = vmul.f32 %v157, 0.5
  %v162 = vmul.f32 %v158, 0.5
  %v163 = vmul.f32 %v159, 0.5
  %v164 = vadd.f32 %v160, 0.5
  %v165 = vadd.f32 %v161, 0.5
  %v166 = vadd.f32 %v162, 0.5
  %v167 = vadd.f32 %v163, 0.5
  %v168 = vpack.c.bf16 %v165, %v164
  %v169 = vpack.c.bf16 %v167, %v166
  %v170 = vlaneseq
  %v171 = vshrl.u32 %v170, 7
  %v172 = vsub.s32 0, %v171
  %v173 = vrot.slane %v43, %v172
  %v190 = vunpack.c.l.b16 %v52
  %v191 = vunpack.c.l.b16 %v53
  %v192 = vunpack.c.l.b16 %v54
  %v193 = vunpack.c.l.b16 %v55
  %v194 = vunpack.c.l.b16 %v56
  %v195 = vunpack.c.l.b16 %v57
  %v196 = vunpack.c.l.b16 %v58
  %v197 = vunpack.c.l.b16 %v59
  %v198 = vunpack.c.l.b16 %v60
  %v199 = vunpack.c.l.b16 %v61
  %v200 = vunpack.c.l.b16 %v62
  %v201 = vunpack.c.l.b16 %v63
  %v202 = vunpack.c.l.b16 %v64
  %v203 = vunpack.c.l.b16 %v65
  %v204 = vunpack.c.l.b16 %v66
  %v205 = vunpack.c.l.b16 %v67
  %v206 = vpack.c.b16 %v191, %v190
  %v207 = vpack.c.b16 %v193, %v192
  %v208 = vpack.c.b16 %v195, %v194
  %v209 = vpack.c.b16 %v197, %v196
  %v210 = vpack.c.b16 %v199, %v198
  %v211 = vpack.c.b16 %v201, %v200
  %v212 = vpack.c.b16 %v203, %v202
  %v213 = vpack.c.b16 %v205, %v204
  %222 = vmatprep.subr.bf16.mxu0 0
  %223 = vmatpush1.bf16.msra.mxu0 %v206
  %224 = vmatprep.subr.bf16.mxu0 0
  %225 = vmatpush1.bf16.msra.mxu0 %v207
  %226 = vmatprep.subr.bf16.mxu0 0
  %227 = vmatpush1.bf16.msra.mxu0 %v208
  %228 = vmatprep.subr.bf16.mxu0 0
  %229 = vmatpush1.bf16.msra.mxu0 %v209
  %230 = vmatprep.subr.bf16.mxu0 0
  %231 = vmatpush1.bf16.msra.mxu0 %v210
  %232 = vmatprep.subr.bf16.mxu0 0
  %233 = vmatpush1.bf16.msra.mxu0 %v211
  %234 = vmatprep.subr.bf16.mxu0 0
  %235 = vmatpush1.bf16.msra.mxu0 %v212
  %236 = vmatprep.subr.bf16.mxu0 0
  %237 = vmatpush1.bf16.msra.mxu0 %v213
  %238 = vmatprep.subr.bf16.mxu0 0
  %239 = vmatpush1.bf16.msra.mxu0 0
  %240 = vmatprep.subr.bf16.mxu0 0
  %241 = vmatpush1.bf16.msra.mxu0 0
  %242 = vmatprep.subr.bf16.mxu0 0
  %243 = vmatpush1.bf16.msra.mxu0 0
  %244 = vmatprep.subr.bf16.mxu0 0
  %245 = vmatpush1.bf16.msra.mxu0 0
  %246 = vmatprep.subr.bf16.mxu0 0
  %247 = vmatpush1.bf16.msra.mxu0 0
  %248 = vmatprep.subr.bf16.mxu0 0
  %249 = vmatpush1.bf16.msra.mxu0 0
  %250 = vmatprep.subr.bf16.mxu0 0
  %251 = vmatpush1.bf16.msra.mxu0 0
  %252 = vmatprep.subr.bf16.mxu0 0
  %253 = vmatpush1.bf16.msra.mxu0 0
  %254 = vmatprep.mubr.bf16.mxu0 0
  %255 = vmatmul.mubr.bf16.gmra.mrb[0].mxu0 %v168
  %v256 = vpop.f32.mrb[0].mxu0
  %v257 = vadd.f32 %v173, %v256
  %v258 = vpop.f32.mrb[0].mxu0
  %v259 = vpop.f32.mrb[0].mxu0
  %v260 = vadd.f32 %v173, %v259
  %v261 = vpop.f32.mrb[0].mxu0
  %262 = vmatprep.mubr.bf16.mxu0 0
  %263 = vmatmul.mubr.bf16.gmra.mrb[0].mxu0 %v169
  %v264 = vpop.f32.mrb[0].mxu0
  %v265 = vadd.f32 %v173, %v264
  %v266 = vpop.f32.mrb[0].mxu0
  %v267 = vpop.f32.mrb[0].mxu0
  %v268 = vadd.f32 %v173, %v267
  %v269 = vpop.f32.mrb[0].mxu0
  %270 = vdwg.mxu0
  %v271 = vmul.f32 %v257, 0.5
  %v272 = vmul.f32 %v260, 0.5
  %v273 = vmul.f32 %v265, 0.5
  %v274 = vmul.f32 %v268, 0.5
  %v275 = vtanh.pop %v271
  %v276 = vtanh.pop %v272
  %v277 = vtanh.pop %v273
  %v278 = vtanh.pop %v274
  %v279 = vmul.f32 %v275, 0.5
  %v280 = vmul.f32 %v276, 0.5
  %v281 = vmul.f32 %v277, 0.5
  %v282 = vmul.f32 %v278, 0.5
  %v283 = vadd.f32 %v279, 0.5
  %v284 = vadd.f32 %v280, 0.5
  %v285 = vadd.f32 %v281, 0.5
  %v286 = vadd.f32 %v282, 0.5
  %v287 = vlaneseq
  %v288 = vshrl.u32 %v287, 7
  %v289 = vsub.s32 0, %v288
  %v290 = vrot.slane %v44, %v289
  %v291 = vmul.f32 %v283, %v290
  %v292 = vmul.f32 %v284, %v290
  %v293 = vmul.f32 %v285, %v290
  %v294 = vmul.f32 %v286, %v290
  %295 = vadd.xlane.f32.xlu0 %v291
  %v296 = vpop.xlane.xlu0 %295
  %297 = vadd.xlane.f32.xlu0 %v292
  %v298 = vpop.xlane.xlu0 %297
  %299 = vadd.xlane.f32.xlu0 %v293
  %v300 = vpop.xlane.xlu0 %299
  %301 = vadd.xlane.f32.xlu0 %v294
  %v302 = vpop.xlane.xlu0 %301
  %v303 = vlaneseq
  %v304 = vshrl.u32 %v303, 7
  %v305 = vsub.s32 0, %v304
  %v306 = vrot.slane %v50, %v305
  %v307 = vadd.f32 %v296, %v306
  %v308 = vadd.f32 %v298, %v306
  %v309 = vadd.f32 %v300, %v306
  %v310 = vadd.f32 %v302, %v306
  %312 = vset.pattern.permute.xlu0 0
  %313 = vperm.xlu0 %312, %v307
  %v314 = vpop.permute.xlu0 %313
  %317 = vset.pattern.permute.xlu0 0
  %318 = vperm.xlu0 %317, %v308
  %v319 = vpop.permute.xlu0 %318
  %322 = vset.pattern.permute.xlu0 0
  %323 = vperm.xlu0 %322, %v309
  %v324 = vpop.permute.xlu0 %323
  %327 = vset.pattern.permute.xlu0 0
  %328 = vperm.xlu0 %327, %v310
  %v329 = vpop.permute.xlu0 %328
  %v331 = vlaneseq
  %v332 = vshrl.u32 %v331, 7
  %v333 = vsub.s32 0, %v332
  %v334 = vrot.slane %v45, %v333
  %v335 = vmul.f32 %v314, %v334
  %v336 = vmul.f32 %v319, %v334
  %v337 = vmul.f32 %v324, %v334
  %v338 = vmul.f32 %v329, %v334
  %340 = vset.pattern.permute.xlu0 0
  %341 = vperm.xlu0 %340, %v32
  %v342 = vpop.permute.xlu0 %341
  %345 = vset.pattern.permute.xlu0 0
  %346 = vperm.xlu0 %345, %v33
  %v347 = vpop.permute.xlu0 %346
  %350 = vset.pattern.permute.xlu0 0
  %351 = vperm.xlu0 %350, %v34
  %v352 = vpop.permute.xlu0 %351
  %355 = vset.pattern.permute.xlu0 0
  %356 = vperm.xlu0 %355, %v35
  %v357 = vpop.permute.xlu0 %356
  %v359 = vlaneseq
  %v360 = vshrl.u32 %v359, 7
  %v361 = vsub.s32 0, %v360
  %v362 = vrot.slane %v46, %v361
  %v363 = vmul.f32 %v342, %v362
  %v364 = vmul.f32 %v347, %v362
  %v365 = vmul.f32 %v352, %v362
  %v366 = vmul.f32 %v357, %v362
  %v367 = vadd.f32 %v335, %v363
  %v368 = vadd.f32 %v336, %v364
  %v369 = vadd.f32 %v337, %v365
  %v370 = vadd.f32 %v338, %v366
  %v371 = vlaneseq
  %v372 = vshrl.u32 %v371, 7
  %v373 = vsub.s32 0, %v372
  %v374 = vrot.slane %v47, %v373
  %v375 = vadd.f32 %v367, %v374
  %v376 = vadd.f32 %v368, %v374
  %v377 = vadd.f32 %v369, %v374
  %v378 = vadd.f32 %v370, %v374
  %v379 = vmul.f32 %v375, 0.5
  %v380 = vmul.f32 %v376, 0.5
  %v381 = vmul.f32 %v377, 0.5
  %v382 = vmul.f32 %v378, 0.5
  %v383 = vtanh.pop %v379
  %v384 = vtanh.pop %v380
  %v385 = vtanh.pop %v381
  %v386 = vtanh.pop %v382
  %v387 = vmul.f32 %v383, 0.5
  %v388 = vmul.f32 %v384, 0.5
  %v389 = vmul.f32 %v385, 0.5
  %v390 = vmul.f32 %v386, 0.5
  %v391 = vadd.f32 %v387, 0.5
  %v392 = vadd.f32 %v388, 0.5
  %v393 = vadd.f32 %v389, 0.5
  %v394 = vadd.f32 %v390, 0.5
  %v395 = vpack.c.bf16 %v392, %v391
  %v396 = vpack.c.bf16 %v394, %v393
  %v397 = vlaneseq
  %v398 = vshrl.u32 %v397, 7
  %v399 = vsub.s32 0, %v398
  %v400 = vrot.slane %v48, %v399
  %v417 = vunpack.c.l.b16 %v68
  %v418 = vunpack.c.l.b16 %v69
  %v419 = vunpack.c.l.b16 %v70
  %v420 = vunpack.c.l.b16 %v71
  %v421 = vunpack.c.l.b16 %v72
  %v422 = vunpack.c.l.b16 %v73
  %v423 = vunpack.c.l.b16 %v74
  %v424 = vunpack.c.l.b16 %v75
  %v425 = vunpack.c.l.b16 %v76
  %v426 = vunpack.c.l.b16 %v77
  %v427 = vunpack.c.l.b16 %v78
  %v428 = vunpack.c.l.b16 %v79
  %v429 = vunpack.c.l.b16 %v80
  %v430 = vunpack.c.l.b16 %v81
  %v431 = vunpack.c.l.b16 %v82
  %v432 = vunpack.c.l.b16 %v83
  %v433 = vpack.c.b16 %v418, %v417
  %v434 = vpack.c.b16 %v420, %v419
  %v435 = vpack.c.b16 %v422, %v421
  %v436 = vpack.c.b16 %v424, %v423
  %v437 = vpack.c.b16 %v426, %v425
  %v438 = vpack.c.b16 %v428, %v427
  %v439 = vpack.c.b16 %v430, %v429
  %v440 = vpack.c.b16 %v432, %v431
  %449 = vmatprep.subr.bf16.mxu0 0
  %450 = vmatpush1.bf16.msra.mxu0 %v433
  %451 = vmatprep.subr.bf16.mxu0 0
  %452 = vmatpush1.bf16.msra.mxu0 %v434
  %453 = vmatprep.subr.bf16.mxu0 0
  %454 = vmatpush1.bf16.msra.mxu0 %v435
  %455 = vmatprep.subr.bf16.mxu0 0
  %456 = vmatpush1.bf16.msra.mxu0 %v436
  %457 = vmatprep.subr.bf16.mxu0 0
  %458 = vmatpush1.bf16.msra.mxu0 %v437
  %459 = vmatprep.subr.bf16.mxu0 0
  %460 = vmatpush1.bf16.msra.mxu0 %v438
  %461 = vmatprep.subr.bf16.mxu0 0
  %462 = vmatpush1.bf16.msra.mxu0 %v439
  %463 = vmatprep.subr.bf16.mxu0 0
  %464 = vmatpush1.bf16.msra.mxu0 %v440
  %465 = vmatprep.subr.bf16.mxu0 0
  %466 = vmatpush1.bf16.msra.mxu0 0
  %467 = vmatprep.subr.bf16.mxu0 0
  %468 = vmatpush1.bf16.msra.mxu0 0
  %469 = vmatprep.subr.bf16.mxu0 0
  %470 = vmatpush1.bf16.msra.mxu0 0
  %471 = vmatprep.subr.bf16.mxu0 0
  %472 = vmatpush1.bf16.msra.mxu0 0
  %473 = vmatprep.subr.bf16.mxu0 0
  %474 = vmatpush1.bf16.msra.mxu0 0
  %475 = vmatprep.subr.bf16.mxu0 0
  %476 = vmatpush1.bf16.msra.mxu0 0
  %477 = vmatprep.subr.bf16.mxu0 0
  %478 = vmatpush1.bf16.msra.mxu0 0
  %479 = vmatprep.subr.bf16.mxu0 0
  %480 = vmatpush1.bf16.msra.mxu0 0
  %481 = vmatprep.mubr.bf16.mxu0 0
  %482 = vmatmul.mubr.bf16.gmra.mrb[0].mxu0 %v395
  %v483 = vpop.f32.mrb[0].mxu0
  %v484 = vadd.f32 %v400, %v483
  %v485 = vpop.f32.mrb[0].mxu0
  %v486 = vpop.f32.mrb[0].mxu0
  %v487 = vadd.f32 %v400, %v486
  %v488 = vpop.f32.mrb[0].mxu0
  %489 = vmatprep.mubr.bf16.mxu0 0
  %490 = vmatmul.mubr.bf16.gmra.mrb[0].mxu0 %v396
  %v491 = vpop.f32.mrb[0].mxu0
  %v492 = vadd.f32 %v400, %v491
  %v493 = vpop.f32.mrb[0].mxu0
  %v494 = vpop.f32.mrb[0].mxu0
  %v495 = vadd.f32 %v400, %v494
  %v496 = vpop.f32.mrb[0].mxu0
  %497 = vdwg.mxu0
  %v498 = vmul.f32 %v484, 0.5
  %v499 = vmul.f32 %v487, 0.5
  %v500 = vmul.f32 %v492, 0.5
  %v501 = vmul.f32 %v495, 0.5
  %v502 = vtanh.pop %v498
  %v503 = vtanh.pop %v499
  %v504 = vtanh.pop %v500
  %v505 = vtanh.pop %v501
  %v506 = vmul.f32 %v502, 0.5
  %v507 = vmul.f32 %v503, 0.5
  %v508 = vmul.f32 %v504, 0.5
  %v509 = vmul.f32 %v505, 0.5
  %v510 = vadd.f32 %v506, 0.5
  %v511 = vadd.f32 %v507, 0.5
  %v512 = vadd.f32 %v508, 0.5
  %v513 = vadd.f32 %v509, 0.5
  %v514 = vlaneseq
  %v515 = vshrl.u32 %v514, 7
  %v516 = vsub.s32 0, %v515
  %v517 = vrot.slane %v49, %v516
  %v518 = vmul.f32 %v510, %v517
  %v519 = vmul.f32 %v511, %v517
  %v520 = vmul.f32 %v512, %v517
  %v521 = vmul.f32 %v513, %v517
  %522 = vadd.xlane.f32.xlu0 %v518
  %v523 = vpop.xlane.xlu0 %522
  %524 = vadd.xlane.f32.xlu0 %v519
  %v525 = vpop.xlane.xlu0 %524
  %526 = vadd.xlane.f32.xlu0 %v520
  %v527 = vpop.xlane.xlu0 %526
  %528 = vadd.xlane.f32.xlu0 %v521
  %v529 = vpop.xlane.xlu0 %528
  %v530 = vlaneseq
  %v531 = vshrl.u32 %v530, 7
  %v532 = vsub.s32 0, %v531
  %v533 = vrot.slane %v51, %v532
  %v534 = vadd.f32 %v523, %v533
  %v535 = vadd.f32 %v525, %v533
  %v536 = vadd.f32 %v527, %v533
  %v537 = vadd.f32 %v529, %v533
  %v538 = vmul.f32 %v534, 0.5
  %v539 = vmul.f32 %v535, 0.5
  %v540 = vmul.f32 %v536, 0.5
  %v541 = vmul.f32 %v537, 0.5
  %v542 = vtanh.pop %v538
  %v543 = vtanh.pop %v539
  %v544 = vtanh.pop %v540
  %v545 = vtanh.pop %v541
  %v546 = vmul.f32 %v542, 0.5
  %v547 = vmul.f32 %v543, 0.5
  %v548 = vmul.f32 %v544, 0.5
  %v549 = vmul.f32 %v545, 0.5
  %v550 = vadd.f32 %v546, 0.5
  %v551 = vadd.f32 %v547, 0.5
  %v552 = vadd.f32 %v548, 0.5
  %v553 = vadd.f32 %v549, 0.5
  %vm554 = vcmask 7168
  %555 = vst.msk [vmem:[%s6] sm:$0xff] %vm554, %v307
  %556 = vst.msk [vmem:[%s6 + $0x8] sm:$0xff] %vm554, %v308
  %557 = vst.msk [vmem:[%s6 + $0x10] sm:$0xff] %vm554, %v309
  %558 = vst.msk [vmem:[%s6 + $0x18] sm:$0xff] %vm554, %v310
  %v559 = vmul.f32 %v550, %v36
  %v560 = vmul.f32 %v551, %v37
  %v561 = vmul.f32 %v552, %v38
  %v562 = vmul.f32 %v553, %v39
  %567 = vrot.lane.b32.xlu0 %v559, 1
  %v568 = vpop.permute.xlu0 %567
  %569 = vrot.lane.b32.xlu0 %v560, 1
  %v570 = vpop.permute.xlu0 %569
  %571 = vrot.lane.b32.xlu0 %v561, 1
  %v572 = vpop.permute.xlu0 %571
  %573 = vrot.lane.b32.xlu0 %v562, 1
  %v574 = vpop.permute.xlu0 %573
  %vm579 = vcmask 15368
  %580 = vst.msk [vmem:[%s6] sm:$0xff] %vm579, %v568
  %581 = vst.msk [vmem:[%s6 + $0x8] sm:$0xff] %vm579, %v570
  %582 = vst.msk [vmem:[%s6 + $0x10] sm:$0xff] %vm579, %v572
  %583 = vst.msk [vmem:[%s6 + $0x18] sm:$0xff] %vm579, %v574
  // Predicated region
  $region26: #{tpu_custom_call.1} parent=0 // pred_check
    _
  $region27: #{tpu_custom_call.1} parent=0 // pred_check_branch
    %585 = sbr.rel (0) target = $region29
  $region28: #{tpu_custom_call.1} parent=0 // pred_region
    _
  $region29: #{tpu_custom_call.1} parent=0 // pred_fallthru
    _
  // Predicated region
  $region30: #{tpu_custom_call.1} parent=0 // pred_check
    _
  $region31: #{tpu_custom_call.1} parent=0 // pred_check_branch
    %587 = sbr.rel (0) target = $region33
  $region32: #{tpu_custom_call.1} parent=0 // pred_region
    _
  $region33: #{tpu_custom_call.1} parent=0 // pred_fallthru
    _

</llo_original>
